<compile_context>
chip_gen: v5e
topology: v5e:2x2
jax: 0.10.0
libtpu: 0.0.40
codegen_flags: <defaults>
</compile_context>

<pallas_src>
import functools

import jax
import jax.numpy as jnp
from jax.experimental import pallas as pl
from jax.experimental.pallas import tpu as pltpu


def _triplet_kernel(a_ref, p_ref, n_ref, o_ref, acc_ref, *,
                    margin, n_rows, tile_n, tiles_per_split, full_tiles,
                    needs_mask, two_core):
    if two_core:
        i = pl.program_id(1)                       # reduction axis
        g = pl.program_id(0) * tiles_per_split + i  # global tile id
        last_i = pl.num_programs(1) - 1
    else:
        i = pl.program_id(0)
        g = i
        last_i = pl.num_programs(0) - 1

    @pl.when(i == 0)
    def _init():
        acc_ref[...] = jnp.zeros_like(acc_ref)

    a = a_ref[...].astype(jnp.float32)
    p = p_ref[...].astype(jnp.float32)
    n = n_ref[...].astype(jnp.float32)

    if margin is None:
        # torch.norm(a - p, 2, dim=1): plain L2 norm (no eps).
        dp = a - p
        dn = a - n
    else:
        # nn.TripletMarginLoss -> F.pairwise_distance(eps=1e-6): eps is added
        # to the elementwise difference before the norm.
        eps = jnp.float32(1e-6)
        dp = a - p + eps
        dn = a - n + eps

    # Lane-axis sum-of-squares on the (otherwise idle) MXU instead of the XLU:
    # (tile_n, D) @ (D, 1).  On v7x the XLU cross-lane reduce would otherwise
    # become the binding VLIW slot; the MXU slot is completely free here.
    ones_col = jnp.ones((a.shape[1], 1), jnp.float32)
    ap = jnp.sqrt(jnp.dot(dp * dp, ones_col,
                          preferred_element_type=jnp.float32))   # (tile_n, 1)
    an = jnp.sqrt(jnp.dot(dn * dn, ones_col,
                          preferred_element_type=jnp.float32))   # (tile_n, 1)

    if margin is None:
        # SoftMarginLoss with target=1: log(1 + exp(-x)), x = an - ap,
        # written as a numerically stable softplus.
        x = an - ap
        per_row = jnp.maximum(-x, 0.0) + jnp.log1p(jnp.exp(-jnp.abs(x)))
    else:
        per_row = jnp.maximum(ap - an + jnp.float32(margin), 0.0)

    if not needs_mask:
        # Every tile is fully populated with valid rows: unmasked fast path.
        acc_ref[...] += jnp.sum(per_row, axis=0, keepdims=True)
    else:
        is_full = g < full_tiles

        @pl.when(is_full)
        def _full_tile():
            acc_ref[...] += jnp.sum(per_row, axis=0, keepdims=True)

        @pl.when(jnp.logical_not(is_full))
        def _tail_tile():
            # Ragged tail (and, on the 2-core split, phantom) tiles: mask the
            # padded rows out *before* the sum so garbage/NaN never reaches
            # the accumulator.
            rows = g * tile_n + jax.lax.broadcasted_iota(
                jnp.int32, per_row.shape, 0)
            masked = jnp.where(rows < n_rows, per_row, 0.0)
            acc_ref[...] += jnp.sum(masked, axis=0, keepdims=True)

    @pl.when(i == last_i)
    def _finalize():
        # Lane-dense (1,128) output block; only lane 0 carries the partial
        # sum so the wrapper can simply jnp.sum() over the whole output.
        lane = jax.lax.broadcasted_iota(jnp.int32, (1, 128), 1)
        o_ref[...] = jnp.where(lane == 0, acc_ref[...], 0.0)


def _vmem_capacity_bytes():
    try:
        return int(pltpu.get_tpu_info().vmem_capacity_bytes)
    except Exception:
        return 64 * 1024 * 1024   # conservative (v7x per-TC VMEM)


def _num_tensorcores():
    # Conservative: only report 2 when we positively identify a dual-TC
    # (v7x-class) chip; v5e/v6e are single-TC and take the simpler path.
    try:
        kind = jax.devices()[0].device_kind.lower().replace(" ", "")
        if "v7" in kind or "tpu7" in kind:
            return 2
    except Exception:
        pass
    return 1


def _sublane(dtype):
    # Sublane granularity: 8 for f32, 16 for bf16, 32 for 8-bit types.
    return 8 * max(1, 4 // jnp.dtype(dtype).itemsize)


def _pick_tile_n(n_rows, d, itemsize, vmem_capacity, sub):
    # VMEM-budget-driven tile: 3 inputs x 2 pipeline buffers of (TILE_N, D)
    # within ~1/4 of physical VMEM (headroom for f32 temps / output / compiler
    # scratch).  Cap raised to 8192 rows so per-step DMA dwarfs the ~0.35us
    # fixed grid-step overhead even at v7x HBM bandwidth.
    budget = vmem_capacity // 4
    per_row = 3 * 2 * d * itemsize
    tile = budget // max(per_row, 1)
    tile = max(sub, min(int(tile), 8192))
    tile = (tile // sub) * sub
    if n_rows <= tile:
        return n_rows            # small-N fast path: one full-dim block
    return tile


def triplet_loss(anchor, pos, neg, margin=None, tile_n=None, num_splits=None):
    """Pallas implementation of Tripletloss.forward; returns a scalar f32.

    Note: the kernel is HBM-bandwidth bound (3*N*D bytes read, trivial FLOPs);
    storing embeddings as bf16 roughly halves end-to-end time on all chips.
    """
    assert anchor.shape == pos.shape == neg.shape and anchor.ndim == 2
    N, D = anchor.shape
    itemsize = jnp.dtype(anchor.dtype).itemsize
    sub = _sublane(anchor.dtype)
    vmem_cap = _vmem_capacity_bytes()

    if tile_n is None:
        tile_n = _pick_tile_n(N, D, itemsize, vmem_cap, sub)
    else:
        tile_n = int(tile_n)
        tile_n = N if tile_n >= N else max(sub, (tile_n // sub) * sub)

    tiles_total = -(-N // tile_n)
    full_tiles = N // tile_n          # number of tiles with no padded rows

    if num_splits is None:
        num_splits = 2 if (_num_tensorcores() >= 2 and tiles_total >= 2) else 1
    num_splits = max(1, min(int(num_splits), tiles_total))
    two_core = num_splits == 2

    tiles_per_split = -(-tiles_total // num_splits)
    total_grid_tiles = num_splits * tiles_per_split
    needs_mask = full_tiles < total_grid_tiles

    # Explicit scoped-VMEM limit: double-buffered input tiles + f32-temps
    # headroom, never more than ~7/8 of the chip's physical VMEM.
    needed = 3 * 2 * tile_n * D * itemsize
    temps = 6 * tile_n * D * 4
    vmem_limit = max(needed + temps + (2 << 20), 32 << 20)
    vmem_limit = int(min(vmem_limit, vmem_cap * 7 // 8))
    vmem_limit = int(max(vmem_limit, needed + (1 << 20)))

    kernel = functools.partial(
        _triplet_kernel, margin=margin, n_rows=N, tile_n=tile_n,
        tiles_per_split=tiles_per_split, full_tiles=full_tiles,
        needs_mask=needs_mask, two_core=two_core)

    flops = 9 * N * D
    transcendentals = (4 if margin is None else 2) * N
    bytes_accessed = 3 * N * D * itemsize + num_splits * 128 * 4

    last_block = tiles_total - 1
    if two_core:
        grid = (num_splits, tiles_per_split)

        def in_map(c, i):
            # Clamp phantom tiles (odd tile counts) to the last real block;
            # the in-kernel row mask zeroes their contribution.
            return (jnp.minimum(c * tiles_per_split + i, last_block), 0)

        in_spec = pl.BlockSpec((tile_n, D), in_map)
        out_spec = pl.BlockSpec((1, 128), lambda c, i: (0, c))
        out_shape = jax.ShapeDtypeStruct((1, 128 * num_splits), jnp.float32)
        dim_sem = (pltpu.CORE_PARALLEL, pltpu.ARBITRARY)
    else:
        grid = (tiles_total,)
        in_spec = pl.BlockSpec((tile_n, D), lambda i: (i, 0))
        out_spec = pl.BlockSpec((1, 128), lambda i: (0, 0))
        out_shape = jax.ShapeDtypeStruct((1, 128), jnp.float32)
        dim_sem = ("arbitrary",)

    partials = pl.pallas_call(
        kernel,
        out_shape=out_shape,
        grid_spec=pltpu.PrefetchScalarGridSpec(
            num_scalar_prefetch=0,
            grid=grid,
            in_specs=[in_spec, in_spec, in_spec],
            out_specs=out_spec,
            scratch_shapes=[pltpu.VMEM((1, 1), jnp.float32)],
        ),
        compiler_params=pltpu.CompilerParams(
            dimension_semantics=dim_sem,
            vmem_limit_bytes=vmem_limit,
        ),
        cost_estimate=pl.CostEstimate(
            flops=flops, transcendentals=transcendentals,
            bytes_accessed=bytes_accessed),
    )(anchor, pos, neg)

    # mean = (sum of per-split partial sums) * 1/N
    return jnp.sum(partials) * jnp.float32(1.0 / N)


def _ref_triplet_loss(anchor, pos, neg, margin=None):
    a = anchor.astype(jnp.float32)
    p = pos.astype(jnp.float32)
    n = neg.astype(jnp.float32)
    if margin is None:
        ap = jnp.sqrt(jnp.sum((a - p) ** 2, axis=1))
        an = jnp.sqrt(jnp.sum((a - n) ** 2, axis=1))
        x = an - ap
        return jnp.mean(jnp.maximum(-x, 0.0) + jnp.log1p(jnp.exp(-jnp.abs(x))))
    eps = 1e-6
    ap = jnp.sqrt(jnp.sum((a - p + eps) ** 2, axis=1))
    an = jnp.sqrt(jnp.sum((a - n + eps) ** 2, axis=1))
    return jnp.mean(jnp.maximum(ap - an + margin, 0.0))


if __name__ == "__main__":
    key = jax.random.PRNGKey(0)
    k1, k2, k3 = jax.random.split(key, 3)

    # Small FaceNet-style embeddings: batch=56 (ragged vs. tile), dim=128.
    N, D = 56, 128
    anchor = jax.random.normal(k1, (N, D), dtype=jnp.float32)
    pos = jax.random.normal(k2, (N, D), dtype=jnp.float32)
    neg = jax.random.normal(k3, (N, D), dtype=jnp.float32)

    # 1) margin=None (SoftMarginLoss) with a small explicit tile: exercises
    #    multi-tile accumulation and the gated ragged-tail masking.
    out = jax.block_until_ready(
        triplet_loss(anchor, pos, neg, margin=None, tile_n=16))
    ref = _ref_triplet_loss(anchor, pos, neg, margin=None)
    assert jnp.allclose(out, ref, atol=1e-5, rtol=1e-5), (out, ref)

    # 2) margin branch (TripletMarginLoss p=2) with auto (VMEM-derived) tile:
    #    small-N fast path (single full-dim block, no masking).
    out_m = jax.block_until_ready(triplet_loss(anchor, pos, neg, margin=0.3))
    ref_m = _ref_triplet_loss(anchor, pos, neg, margin=0.3)
    assert jnp.allclose(out_m, ref_m, atol=1e-5, rtol=1e-5), (out_m, ref_m)

    # 3) bf16 storage in HBM (kernel computes in f32); reference evaluated on
    #    the same bf16 inputs so it should match tightly.
    a16, p16, n16 = (x.astype(jnp.bfloat16) for x in (anchor, pos, neg))
    out_b = jax.block_until_ready(
        triplet_loss(a16, p16, n16, margin=0.3, tile_n=16))
    ref_b = _ref_triplet_loss(a16, p16, n16, margin=0.3)
    assert jnp.allclose(out_b, ref_b, atol=1e-4, rtol=1e-4), (out_b, ref_b)

    # 4) exact-division case: exercises the fully unmasked multi-tile path.
    a64 = jnp.concatenate([anchor, anchor[:8]], axis=0)
    p64 = jnp.concatenate([pos, pos[:8]], axis=0)
    n64 = jnp.concatenate([neg, neg[:8]], axis=0)
    out_e = jax.block_until_ready(
        triplet_loss(a64, p64, n64, margin=None, tile_n=32))
    ref_e = _ref_triplet_loss(a64, p64, n64, margin=None)
    assert jnp.allclose(out_e, ref_e, atol=1e-5, rtol=1e-5), (out_e, ref_e)

    print("KERNEL_OK")
</pallas_src>

<mosaic_0001>
module attributes {stable_mosaic.version = 11 : i64} {
  func.func @_triplet_kernel(%arg0: i32, %arg1: memref<16x128xf32, #tpu.memory_space<vmem>>, %arg2: memref<16x128xf32, #tpu.memory_space<vmem>>, %arg3: memref<16x128xf32, #tpu.memory_space<vmem>>, %arg4: memref<1x128xf32, #tpu.memory_space<vmem>>, %arg5: memref<1x1xf32, #tpu.memory_space<vmem>>) attributes {dimension_semantics = [#tpu.dimension_semantics<arbitrary>], iteration_bounds = array<i64: 4>, scalar_prefetch = 0 : i64, scratch_operands = 1 : i64, tpu.core_type = #tpu.core_type<tc>, window_params = [{transform_indices = @transform_0, window_bounds = array<i64: 16, 128>}, {transform_indices = @transform_1, window_bounds = array<i64: 16, 128>}, {transform_indices = @transform_2, window_bounds = array<i64: 16, 128>}, {pipeline_mode = #tpu.pipeline_mode<synchronous>, transform_indices = @transform_3, window_bounds = array<i64: 1, 128>}]} {
    %c0_i32 = arith.constant 0 : i32
    %0 = arith.cmpi eq, %arg0, %c0_i32 : i32
    %1 = arith.extui %0 : i1 to i32
    %c0_i32_0 = arith.constant 0 : i32
    %2 = arith.cmpi ne, %1, %c0_i32_0 : i32
    scf.if %2 {
      %cst_15 = arith.constant 0.000000e+00 : f32
      %35 = vector.broadcast %cst_15 : f32 to vector<1x1xf32>
      %c0_16 = arith.constant 0 : index
      %c0_17 = arith.constant 0 : index
      %36 = vector.load %arg5[%c0_16, %c0_17] : memref<1x1xf32, #tpu.memory_space<vmem>>, vector<1x1xf32>
      tpu.vector_store %arg5[%c0_16, %c0_17], %35 {strides = array<i32>} : memref<1x1xf32, #tpu.memory_space<vmem>>, vector<1x1xf32>,
    } else {
    }
    %c0 = arith.constant 0 : index
    %c0_1 = arith.constant 0 : index
    %3 = vector.load %arg1[%c0, %c0_1] : memref<16x128xf32, #tpu.memory_space<vmem>>, vector<16x128xf32>
    %c0_2 = arith.constant 0 : index
    %c0_3 = arith.constant 0 : index
    %4 = vector.load %arg2[%c0_2, %c0_3] : memref<16x128xf32, #tpu.memory_space<vmem>>, vector<16x128xf32>
    %c0_4 = arith.constant 0 : index
    %c0_5 = arith.constant 0 : index
    %5 = vector.load %arg3[%c0_4, %c0_5] : memref<16x128xf32, #tpu.memory_space<vmem>>, vector<16x128xf32>
    %6 = arith.subf %3, %4 : vector<16x128xf32>
    %7 = arith.subf %3, %5 : vector<16x128xf32>
    %cst = arith.constant 1.000000e+00 : f32
    %8 = vector.broadcast %cst : f32 to vector<128x1xf32>
    %9 = arith.mulf %6, %6 : vector<16x128xf32>
    %cst_6 = arith.constant dense<0.000000e+00> : vector<16x1xf32>
    %10 = tpu.matmul %9, %8, %cst_6 {dimension_numbers = #tpu.dot_dimension_numbers<[1], [0], [0], [1], [0, 0, 1, 1], [], []>} : vector<16x128xf32>, vector<128x1xf32>, vector<16x1xf32> -> vector<16x1xf32>
    %11 = math.sqrt %10 : vector<16x1xf32>
    %12 = arith.mulf %7, %7 : vector<16x128xf32>
    %cst_7 = arith.constant dense<0.000000e+00> : vector<16x1xf32>
    %13 = tpu.matmul %12, %8, %cst_7 {dimension_numbers = #tpu.dot_dimension_numbers<[1], [0], [0], [1], [0, 0, 1, 1], [], []>} : vector<16x128xf32>, vector<128x1xf32>, vector<16x1xf32> -> vector<16x1xf32>
    %14 = math.sqrt %13 : vector<16x1xf32>
    %15 = arith.subf %14, %11 : vector<16x1xf32>
    %cst_8 = arith.constant 0.000000e+00 : f32
    %16 = vector.broadcast %cst_8 : f32 to vector<16x1xf32>
    %17 = arith.subf %16, %15 : vector<16x1xf32>
    %cst_9 = arith.constant 0.000000e+00 : f32
    %18 = vector.broadcast %cst_9 : f32 to vector<16x1xf32>
    %19 = arith.maximumf %17, %18 : vector<16x1xf32>
    %20 = math.absf %15 : vector<16x1xf32>
    %cst_10 = arith.constant 0.000000e+00 : f32
    %21 = vector.broadcast %cst_10 : f32 to vector<16x1xf32>
    %22 = arith.subf %21, %20 : vector<16x1xf32>
    %23 = math.exp %22 : vector<16x1xf32>
    %24 = math.log1p %23 : vector<16x1xf32>
    %25 = arith.addf %19, %24 : vector<16x1xf32>
    %c3_i32 = arith.constant 3 : i32
    %26 = arith.cmpi slt, %arg0, %c3_i32 : i32
    %27 = arith.extui %26 : i1 to i32
    %c0_i32_11 = arith.constant 0 : i32
    %28 = arith.cmpi ne, %27, %c0_i32_11 : i32
    scf.if %28 {
      %c0_15 = arith.constant 0 : index
      %c0_16 = arith.constant 0 : index
      %35 = vector.load %arg5[%c0_15, %c0_16] : memref<1x1xf32, #tpu.memory_space<vmem>>, vector<1x1xf32>
      %cst_17 = arith.constant dense<0.000000e+00> : vector<1xf32>
      %36 = vector.multi_reduction <add>, %25, %cst_17 [0] : vector<16x1xf32> to vector<1xf32>
      %37 = vector.shape_cast %36 : vector<1xf32> to vector<1x1xf32>
      %38 = arith.addf %35, %37 : vector<1x1xf32>
      %c0_18 = arith.constant 0 : index
      %c0_19 = arith.constant 0 : index
      %39 = vector.load %arg5[%c0_18, %c0_19] : memref<1x1xf32, #tpu.memory_space<vmem>>, vector<1x1xf32>
      tpu.vector_store %arg5[%c0_18, %c0_19], %38 {strides = array<i32>} : memref<1x1xf32, #tpu.memory_space<vmem>>, vector<1x1xf32>,
    } else {
    }
    %true = arith.constant true
    %29 = arith.xori %26, %true : i1
    %30 = arith.extui %29 : i1 to i32
    %c0_i32_12 = arith.constant 0 : i32
    %31 = arith.cmpi ne, %30, %c0_i32_12 : i32
    scf.if %31 {
      %c16_i32 = arith.constant 16 : i32
      %35 = arith.muli %arg0, %c16_i32 : i32
      %36 = tpu.iota {dimensions = array<i32: 0>} : vector<16x1xi32>
      %37 = vector.broadcast %35 : i32 to vector<16x1xi32>
      %38 = arith.addi %37, %36 : vector<16x1xi32>
      %c56_i32 = arith.constant 56 : i32
      %39 = vector.broadcast %c56_i32 : i32 to vector<16x1xi32>
      %40 = arith.cmpi slt, %38, %39 : vector<16x1xi32>
      %cst_15 = arith.constant 0.000000e+00 : f32
      %41 = vector.broadcast %cst_15 : f32 to vector<16x1xf32>
      %42 = arith.select %40, %25, %41 : vector<16x1xi1>, vector<16x1xf32>
      %c0_16 = arith.constant 0 : index
      %c0_17 = arith.constant 0 : index
      %43 = vector.load %arg5[%c0_16, %c0_17] : memref<1x1xf32, #tpu.memory_space<vmem>>, vector<1x1xf32>
      %cst_18 = arith.constant dense<0.000000e+00> : vector<1xf32>
      %44 = vector.multi_reduction <add>, %42, %cst_18 [0] : vector<16x1xf32> to vector<1xf32>
      %45 = vector.shape_cast %44 : vector<1xf32> to vector<1x1xf32>
      %46 = arith.addf %43, %45 : vector<1x1xf32>
      %c0_19 = arith.constant 0 : index
      %c0_20 = arith.constant 0 : index
      %47 = vector.load %arg5[%c0_19, %c0_20] : memref<1x1xf32, #tpu.memory_space<vmem>>, vector<1x1xf32>
      tpu.vector_store %arg5[%c0_19, %c0_20], %46 {strides = array<i32>} : memref<1x1xf32, #tpu.memory_space<vmem>>, vector<1x1xf32>,
    } else {
    }
    %c3_i32_13 = arith.constant 3 : i32
    %32 = arith.cmpi eq, %arg0, %c3_i32_13 : i32
    %33 = arith.extui %32 : i1 to i32
    %c0_i32_14 = arith.constant 0 : i32
    %34 = arith.cmpi ne, %33, %c0_i32_14 : i32
    scf.if %34 {
      %35 = tpu.iota {dimensions = array<i32: 1>} : vector<1x128xi32>
      %c0_i32_15 = arith.constant 0 : i32
      %36 = vector.broadcast %c0_i32_15 : i32 to vector<1x128xi32>
      %37 = arith.cmpi eq, %35, %36 : vector<1x128xi32>
      %c0_16 = arith.constant 0 : index
      %c0_17 = arith.constant 0 : index
      %38 = vector.load %arg5[%c0_16, %c0_17] : memref<1x1xf32, #tpu.memory_space<vmem>>, vector<1x1xf32>
      %cst_18 = arith.constant 0.000000e+00 : f32
      %39 = vector.shape_cast %38 : vector<1x1xf32> to vector<1x1xf32>
      %40 = vector.broadcast %39 : vector<1x1xf32> to vector<1x128xf32>
      %41 = vector.broadcast %cst_18 : f32 to vector<1x128xf32>
      %42 = arith.select %37, %40, %41 : vector<1x128xi1>, vector<1x128xf32>
      %c0_19 = arith.constant 0 : index
      %c0_20 = arith.constant 0 : index
      %43 = vector.load %arg4[%c0_19, %c0_20] : memref<1x128xf32, #tpu.memory_space<vmem>>, vector<1x128xf32>
      tpu.vector_store %arg4[%c0_19, %c0_20], %42 {strides = array<i32>} : memref<1x128xf32, #tpu.memory_space<vmem>>, vector<1x128xf32>,
    } else {
    }
    return
  }
  func.func @transform_0(%arg0: i32) -> (i32, i32) {
    %c0_i32 = arith.constant 0 : i32
    %c0_i32_0 = arith.constant 0 : i32
    return %arg0, %c0_i32 : i32, i32
  }
  func.func @transform_1(%arg0: i32) -> (i32, i32) {
    %c0_i32 = arith.constant 0 : i32
    %c0_i32_0 = arith.constant 0 : i32
    return %arg0, %c0_i32 : i32, i32
  }
  func.func @transform_2(%arg0: i32) -> (i32, i32) {
    %c0_i32 = arith.constant 0 : i32
    %c0_i32_0 = arith.constant 0 : i32
    return %arg0, %c0_i32 : i32, i32
  }
  func.func @transform_3(%arg0: i32) -> (i32, i32) {
    %c0_i32 = arith.constant 0 : i32
    %c0_i32_0 = arith.constant 0 : i32
    %c0_i32_1 = arith.constant 0 : i32
    return %c0_i32, %c0_i32_0 : i32, i32
  }
}

</mosaic_0001>

<llo_original>
// kernel: tpu_custom_call.1
$region0: #{tpu_custom_call.1}
  #allocation0 [shape = 'u32[]', space=smem, size = 0x4, offset = 0x4, fixed_abs, tag = 'smem constant byte address 0x4 - core index']
  #allocation1 [shape = 'u32[72,128]{1,0:T(1,128)}', space=vmem, size = 0x9000, scoped, tag = 'internal scratch']
  #allocation2 [shape = 'f32[1,1]{1,0:T(1,128)}', space=vmem, size = 0x200, scoped, tag = 'scratch operand']
  %s0 = inlined_call_operand.hbm [shape: f32[56,128], index: 0, kind: input, shape index: {}]
  %s1 = inlined_call_operand.hbm [shape: f32[56,128], index: 1, kind: input, shape index: {}]
  %s2 = inlined_call_operand.hbm [shape: f32[56,128], index: 2, kind: input, shape index: {}]
  %s3 = inlined_call_operand.hbm [shape: f32[1,128], index: 3, kind: output, shape index: {}]
  %s4 = sld [smem:[#allocation0]]
  $region73: #{tpu_custom_call.1} parent=0
    _
  %s6 = ssub.s32 1, %s4
  %s7 = scalar_select 0, %s6, %s4
  $region1: #{tpu_custom_call.1} parent=0
    #allocation3 [shape = 'u8[16384]{0}', space=vmem, size = 0x4000, scoped, tag = 'input window, operand 0']
    #allocation4 [shape = 's32[2]{0}', space=sflag, size = 0x8, scoped, tag = 'scoped memory for tpu_custom_call.1']
    #allocation5 [shape = 's32[2]{0}', space=sflag, size = 0x8, scoped, tag = 'scoped memory for tpu_custom_call.1']
    #allocation6 [shape = 'u8[16384]{0}', space=vmem, size = 0x4000, scoped, tag = 'input window, operand 1']
    #allocation7 [shape = 's32[2]{0}', space=sflag, size = 0x8, scoped, tag = 'scoped memory for tpu_custom_call.1']
    #allocation8 [shape = 'u8[16384]{0}', space=vmem, size = 0x4000, scoped, tag = 'input window, operand 2']
    #allocation9 [shape = 'u8[512]{0}', space=vmem, size = 0x400, scoped, tag = 'output window, operand 0, single buffered']
    %8 = vsyncpa [#allocation4], 0
    %s9 = scalar_lea.sflag [#allocation4], 1
    %10 = vsyncpa %s9, 0
    %11 = vsyncpa [#allocation7], 0
    %s12 = scalar_lea.sflag [#allocation7], 1
    %13 = vsyncpa %s12, 0
    %14 = vsyncpa [#allocation5], 0
    loop: start=0, step=1, limit=6
    $region2: #{tpu_custom_call.1} parent=1 // loop_pre_header
      _
    $region3: #{tpu_custom_call.1} parent=1 // loop_header
      %s16 = sphi 0, %s20
      %p17 = scmp.ge.s32.totalorder %s16, 6
      %s26 = sphi 0, %s28
      %s29 = sphi 0, %s26
      %s30 = sphi 0, %s29
      %s46 = sphi 0, %s30
      %s52 = sphi 0, %s54
      %s55 = sphi 0, %s52
      %s56 = sphi 0, %s55
      %s72 = sphi 0, %s56
      %s78 = sphi 0, %s80
      %s81 = sphi 0, %s78
      %s82 = sphi 0, %s81
      %s98 = sphi 0, %s82
      %s102 = sphi 0, %s102
      %s104 = sphi 0, %s102
      %s105 = sphi 0, %s104
      %s119 = sphi 0, %s105
    $region4: #{tpu_custom_call.1} parent=1 // loop_header_branch
      %19 = sbr.rel (%p17) target = $region8
    $region5: #{tpu_custom_call.1} parent=1 // loop_body
      %s21 = ssub.s32 %s16, 1
      %s22 = ssub.s32 %s16, 2
      %s23 = sadd.s32 %s16, 1
      %s24 = ssub.s32 %s16, %s23
      %p25 = scmp.eq.s32.totalorder %s24, 0
      %s27 = sadd.s32 %s26, 1
      %s28 = scalar_select %p25, %s26, %s27
      %p31 = pneg %p25
      %p32 = scmp.eq.s32.totalorder %s16, 3
      %p33 = por %p31, %p32
      %p34 = scmp.ne.s32.totalorder %s26, %s29
      %p35 = scmp.eq.s32.totalorder %s16, 0
      %p36 = por %p34, %p35
      %p37 = scmp.ne.s32.totalorder %s26, %s29
      %p38 = scmp.eq.s32.totalorder %s21, 3
      %p39 = por %p37, %p38
      %p40 = scmp.ne.s32.totalorder %s29, %s30
      %p41 = scmp.eq.s32.totalorder %s21, 0
      %p42 = por %p40, %p41
      %p43 = scmp.ne.s32.totalorder %s29, %s30
      %p44 = scmp.eq.s32.totalorder %s22, 3
      %p45 = por %p43, %p44
      %p47 = scmp.ne.s32.totalorder %s30, %s46
      %p48 = scmp.eq.s32.totalorder %s22, 0
      %p49 = por %p47, %p48
      %s50 = ssub.s32 %s16, %s23
      %p51 = scmp.eq.s32.totalorder %s50, 0
      %s53 = sadd.s32 %s52, 1
      %s54 = scalar_select %p51, %s52, %s53
      %p57 = pneg %p51
      %p58 = scmp.eq.s32.totalorder %s16, 3
      %p59 = por %p57, %p58
      %p60 = scmp.ne.s32.totalorder %s52, %s55
      %p61 = scmp.eq.s32.totalorder %s16, 0
      %p62 = por %p60, %p61
      %p63 = scmp.ne.s32.totalorder %s52, %s55
      %p64 = scmp.eq.s32.totalorder %s21, 3
      %p65 = por %p63, %p64
      %p66 = scmp.ne.s32.totalorder %s55, %s56
      %p67 = scmp.eq.s32.totalorder %s21, 0
      %p68 = por %p66, %p67
      %p69 = scmp.ne.s32.totalorder %s55, %s56
      %p70 = scmp.eq.s32.totalorder %s22, 3
      %p71 = por %p69, %p70
      %p73 = scmp.ne.s32.totalorder %s56, %s72
      %p74 = scmp.eq.s32.totalorder %s22, 0
      %p75 = por %p73, %p74
      %s76 = ssub.s32 %s16, %s23
      %p77 = scmp.eq.s32.totalorder %s76, 0
      %s79 = sadd.s32 %s78, 1
      %s80 = scalar_select %p77, %s78, %s79
      %p83 = pneg %p77
      %p84 = scmp.eq.s32.totalorder %s16, 3
      %p85 = por %p83, %p84
      %p86 = scmp.ne.s32.totalorder %s78, %s81
      %p87 = scmp.eq.s32.totalorder %s16, 0
      %p88 = por %p86, %p87
      %p89 = scmp.ne.s32.totalorder %s78, %s81
      %p90 = scmp.eq.s32.totalorder %s21, 3
      %p91 = por %p89, %p90
      %p92 = scmp.ne.s32.totalorder %s81, %s82
      %p93 = scmp.eq.s32.totalorder %s21, 0
      %p94 = por %p92, %p93
      %p95 = scmp.ne.s32.totalorder %s81, %s82
      %p96 = scmp.eq.s32.totalorder %s22, 3
      %p97 = por %p95, %p96
      %p99 = scmp.ne.s32.totalorder %s82, %s98
      %p100 = scmp.eq.s32.totalorder %s22, 0
      %p101 = por %p99, %p100
      %s103 = sadd.s32 %s102, 1
      %p106 = scmp.eq.s32.totalorder %s16, 3
      %p107 = scmp.ne.s32.totalorder %s102, %s104
      %p108 = scmp.eq.s32.totalorder %s16, 0
      %p109 = por %p107, %p108
      %p110 = scmp.ne.s32.totalorder %s102, %s104
      %p111 = scmp.eq.s32.totalorder %s21, 3
      %p112 = por %p110, %p111
      %p113 = scmp.ne.s32.totalorder %s104, %s105
      %p114 = scmp.eq.s32.totalorder %s21, 0
      %p115 = por %p113, %p114
      %p116 = scmp.ne.s32.totalorder %s104, %s105
      %p117 = scmp.eq.s32.totalorder %s22, 3
      %p118 = por %p116, %p117
      %p120 = scmp.ne.s32.totalorder %s105, %s119
      %p121 = scmp.eq.s32.totalorder %s22, 0
      %p122 = por %p120, %p121
      %p123 = scmp.le.s32.totalorder 1, %s16
      %p124 = scmp.lt.s32.totalorder %s16, 5
      %p125 = pnand %p123, %p124
      %p126 = pneg %p125
      // Predicated region
      $region9: #{tpu_custom_call.1} parent=5 // pred_check
        _
      $region10: #{tpu_custom_call.1} parent=5 // pred_check_branch
        %128 = sbr.rel (%p125) target = $region12
      $region11: #{tpu_custom_call.1} parent=5 // pred_region
        %s129 = ssub.s32 %s16, 1
      $region12: #{tpu_custom_call.1} parent=5 // pred_fallthru
        _
      %p130 = scmp.lt.s32.totalorder %s16, 4
      // Predicated region
      $region13: #{tpu_custom_call.1} parent=5 // pred_check
        %p131 = pneg %p130
      $region14: #{tpu_custom_call.1} parent=5 // pred_check_branch
        %133 = sbr.rel (%p131) target = $region16
      $region15: #{tpu_custom_call.1} parent=5 // pred_region
        // Predicated region
        $region17: #{tpu_custom_call.1} parent=15 // pred_check
          %p134 = pneg %p36
        $region18: #{tpu_custom_call.1} parent=15 // pred_check_branch
          %136 = sbr.rel (%p134) target = $region20
        $region19: #{tpu_custom_call.1} parent=15 // pred_region
          %s137 = sand.u32 %s26, 1
          %s138 = scalar_lea.sflag [#allocation4], %s137
          %s139 = sand.u32 %s26, 1
          %s140 = smul.addr %s139, 16
          %s141 = scalar_lea.vmem [#allocation3], %s140
          %s142 = smul.u32 2, %s16
          %s143 = ssub.s32 7, %s142
          %p144 = scmp.lt.s32.totalorder %s143, 2
          %s145 = scalar_select %p144, %s143, 2
          %s146 = smul.u32 8, %s145
          %s147 = ssub.s32 16, %s146
          %s148 = sshll.u32 %s147, 4
          %149 = vsyncadd %s138, %s148
          %p150 = scmp.ne.s32.totalorder 0, %s146
          %s151 = smul.addr %s142, 8
          %s152 = scalar_lea.hbm %s0, %s151
          %s153 = smul.u32 8, %s145
          %s154 = sshll.u32 %s152, 4
          %s155 = int_to_ptr.hbm [resolvable:$true] %s154
          %s156 = sshll.u32 %s141, 4
          %s157 = int_to_ptr.vmem [resolvable:$true] %s156
          %s158 = sshll.u32 %s153, 4
          %162 = dma.hbm_to_vmem [thread:$0]  (%p150), %s155, %s158, %s157, %s138, 128, 128, 8
        $region20: #{tpu_custom_call.1} parent=15 // pred_fallthru
          _
        // Predicated region
        $region21: #{tpu_custom_call.1} parent=15 // pred_check
          %p163 = pneg %p62
        $region22: #{tpu_custom_call.1} parent=15 // pred_check_branch
          %165 = sbr.rel (%p163) target = $region24
        $region23: #{tpu_custom_call.1} parent=15 // pred_region
          %s166 = sand.u32 %s16, 1
          %s167 = scalar_lea.sflag [#allocation7], %s166
          %s168 = sand.u32 %s52, 1
          %s169 = smul.addr %s168, 16
          %s170 = scalar_lea.vmem [#allocation6], %s169
          %s171 = smul.u32 2, %s16
          %s172 = ssub.s32 7, %s171
          %p173 = scmp.lt.s32.totalorder %s172, 2
          %s174 = scalar_select %p173, %s172, 2
          %s175 = smul.u32 8, %s174
          %s176 = ssub.s32 16, %s175
          %s177 = sshll.u32 %s176, 4
          %178 = vsyncadd %s167, %s177
          %p179 = scmp.ne.s32.totalorder 0, %s175
          %s180 = smul.addr %s171, 8
          %s181 = scalar_lea.hbm %s1, %s180
          %s182 = smul.u32 8, %s174
          %s183 = sshll.u32 %s181, 4
          %s184 = int_to_ptr.hbm [resolvable:$true] %s183
          %s185 = sshll.u32 %s170, 4
          %s186 = int_to_ptr.vmem [resolvable:$true] %s185
          %s187 = sshll.u32 %s182, 4
          %191 = dma.hbm_to_vmem [thread:$0]  (%p179), %s184, %s187, %s186, %s167, 128, 128, 8
        $region24: #{tpu_custom_call.1} parent=15 // pred_fallthru
          _
        // Predicated region
        $region25: #{tpu_custom_call.1} parent=15 // pred_check
          %p192 = pneg %p88
        $region26: #{tpu_custom_call.1} parent=15 // pred_check_branch
          %194 = sbr.rel (%p192) target = $region28
        $region27: #{tpu_custom_call.1} parent=15 // pred_region
          %s195 = sand.u32 %s16, 1
          %s196 = scalar_lea.sflag [#allocation7], %s195
          %s197 = sand.u32 %s78, 1
          %s198 = smul.addr %s197, 16
          %s199 = scalar_lea.vmem [#allocation8], %s198
          %s200 = smul.u32 2, %s16
          %s201 = ssub.s32 7, %s200
          %p202 = scmp.lt.s32.totalorder %s201, 2
          %s203 = scalar_select %p202, %s201, 2
          %s204 = smul.u32 8, %s203
          %s205 = ssub.s32 16, %s204
          %s206 = sshll.u32 %s205, 4
          %207 = vsyncadd %s196, %s206
          %p208 = scmp.ne.s32.totalorder 0, %s204
          %s209 = smul.addr %s200, 8
          %s210 = scalar_lea.hbm %s2, %s209
          %s211 = smul.u32 8, %s203
          %s212 = sshll.u32 %s210, 4
          %s213 = int_to_ptr.hbm [resolvable:$true] %s212
          %s214 = sshll.u32 %s199, 4
          %s215 = int_to_ptr.vmem [resolvable:$true] %s214
          %s216 = sshll.u32 %s211, 4
          %220 = dma.hbm_to_vmem [thread:$0]  (%p208), %s213, %s216, %s215, %s196, 128, 128, 8
        $region28: #{tpu_custom_call.1} parent=15 // pred_fallthru
          _
      $region16: #{tpu_custom_call.1} parent=5 // pred_fallthru
        _
      %p221 = scmp.le.s32.totalorder 1, %s16
      %p222 = scmp.lt.s32.totalorder %s16, 5
      %p223 = pnand %p221, %p222
      %p224 = pneg %p223
      // Predicated region
      $region29: #{tpu_custom_call.1} parent=5 // pred_check
        _
      $region30: #{tpu_custom_call.1} parent=5 // pred_check_branch
        %226 = sbr.rel (%p223) target = $region32
      $region31: #{tpu_custom_call.1} parent=5 // pred_region
        %s227 = ssub.s32 %s16, 1
        %s228 = sand.u32 %s29, 1
        %s229 = scalar_lea.sflag [#allocation4], %s228
        %s230 = sand.u32 %s29, 1
        %s231 = smul.addr %s230, 16
        %s232 = scalar_lea.vmem [#allocation3], %s231
        // Predicated region
        $region33: #{tpu_custom_call.1} parent=31 // pred_check
          %p233 = pneg %p42
        $region34: #{tpu_custom_call.1} parent=31 // pred_check_branch
          %235 = sbr.rel (%p233) target = $region36
        $region35: #{tpu_custom_call.1} parent=31 // pred_region
          %237 = dma.done %s229, 256
        $region36: #{tpu_custom_call.1} parent=31 // pred_fallthru
          _
        %s238 = sand.u32 %s21, 1
        %s239 = scalar_lea.sflag [#allocation7], %s238
        %s240 = sand.u32 %s55, 1
        %s241 = smul.addr %s240, 16
        %s242 = scalar_lea.vmem [#allocation6], %s241
        // Predicated region
        $region37: #{tpu_custom_call.1} parent=31 // pred_check
          %p243 = pneg %p68
        $region38: #{tpu_custom_call.1} parent=31 // pred_check_branch
          %245 = sbr.rel (%p243) target = $region40
        $region39: #{tpu_custom_call.1} parent=31 // pred_region
          %247 = dma.done %s239, 256
        $region40: #{tpu_custom_call.1} parent=31 // pred_fallthru
          _
        %s248 = sand.u32 %s21, 1
        %s249 = scalar_lea.sflag [#allocation7], %s248
        %s250 = sand.u32 %s81, 1
        %s251 = smul.addr %s250, 16
        %s252 = scalar_lea.vmem [#allocation8], %s251
        // Predicated region
        $region41: #{tpu_custom_call.1} parent=31 // pred_check
          %p253 = pneg %p94
        $region42: #{tpu_custom_call.1} parent=31 // pred_check_branch
          %255 = sbr.rel (%p253) target = $region44
        $region43: #{tpu_custom_call.1} parent=31 // pred_region
          %257 = dma.done %s249, 256
        $region44: #{tpu_custom_call.1} parent=31 // pred_fallthru
          _
        %s258 = sand.u32 %s29, 1
        %s259 = scalar_lea.sflag [#allocation4], %s258
        %s260 = sand.u32 %s29, 1
        %s261 = smul.addr %s260, 16
        %s262 = scalar_lea.vmem [#allocation3], %s261
        %p263 = pneg %p42
        %p264 = pneg %p39
        %s265 = sand.u32 %s21, 1
        %s266 = scalar_lea.sflag [#allocation7], %s265
        %s267 = sand.u32 %s55, 1
        %s268 = smul.addr %s267, 16
        %s269 = scalar_lea.vmem [#allocation6], %s268
        %p270 = pneg %p68
        %p271 = pneg %p65
        %s272 = sand.u32 %s21, 1
        %s273 = scalar_lea.sflag [#allocation7], %s272
        %s274 = sand.u32 %s81, 1
        %s275 = smul.addr %s274, 16
        %s276 = scalar_lea.vmem [#allocation8], %s275
        %p277 = pneg %p94
        %p278 = pneg %p91
        %p279 = pneg %p115
        %p280 = pneg %p112
        %s281 = smul.u32 2, %s21
        %s282 = ssub.s32 7, %s281
        %p283 = scmp.lt.s32.totalorder %s282, 2
        %s284 = scalar_select %p283, %s282, 2
        %s285 = smul.u32 8, %s284
        %s286 = smul.u32 2, %s21
        %s287 = ssub.s32 7, %s286
        %p288 = scmp.lt.s32.totalorder %s287, 2
        %s289 = scalar_select %p288, %s287, 2
        %s290 = smul.u32 8, %s289
        %s291 = smul.u32 2, %s21
        %s292 = ssub.s32 7, %s291
        %p293 = scmp.lt.s32.totalorder %s292, 2
        %s294 = scalar_select %p293, %s292, 2
        %s295 = smul.u32 8, %s294
        %p296 = scmp.eq.s32.totalorder %s21, 0
        // Predicated region
        $region45: #{tpu_custom_call.1} parent=31 // pred_check
          %p297 = pneg %p296
        $region46: #{tpu_custom_call.1} parent=31 // pred_check_branch
          %299 = sbr.rel (%p297) target = $region48
        $region47: #{tpu_custom_call.1} parent=31 // pred_region
          %vm300 = vcmask 0
          %301 = vst.msk [vmem:[#allocation2] sm:$0x1] %vm300, 0.0
        $region48: #{tpu_custom_call.1} parent=31 // pred_fallthru
          _
        %v302 = vld [vmem:[%s232] sm:$0xff]
        %v303 = vld [vmem:[%s232 + $0x8] sm:$0xff]
        %v304 = vld [vmem:[%s242] sm:$0xff]
        %v305 = vld [vmem:[%s242 + $0x8] sm:$0xff]
        %v306 = vld [vmem:[%s252] sm:$0xff]
        %v307 = vld [vmem:[%s252 + $0x8] sm:$0xff]
        %v308 = vsub.f32 %v302, %v304
        %v309 = vsub.f32 %v303, %v305
        %v310 = vsub.f32 %v302, %v306
        %v311 = vsub.f32 %v303, %v307
        %v312 = vmul.f32 %v308, %v308
        %v313 = vmul.f32 %v309, %v309
        %314 = vmatpush.msra.mxu0 1.0
        %315 = vmatpush.msra.mxu0 1.0
        %316 = vmatpush.msra.mxu0 1.0
        %317 = vmatpush.msra.mxu0 1.0
        %318 = vmatpush.msra.mxu0 1.0
        %319 = vmatpush.msra.mxu0 1.0
        %320 = vmatpush.msra.mxu0 1.0
        %321 = vmatpush.msra.mxu0 1.0
        %322 = vmatpush.msra.mxu0 1.0
        %323 = vmatpush.msra.mxu0 1.0
        %324 = vmatpush.msra.mxu0 1.0
        %325 = vmatpush.msra.mxu0 1.0
        %326 = vmatpush.msra.mxu0 1.0
        %327 = vmatpush.msra.mxu0 1.0
        %328 = vmatpush.msra.mxu0 1.0
        %329 = vmatpush.msra.mxu0 1.0
        %330 = vmatmul.f32.gmra.mxu0 %v312
        %v331 = vpop.f32.mrf.mxu0
        %v332 = vadd.f32 0.0, %v331
        %333 = vmatmul.f32.gmra.mxu0 %v313
        %v334 = vpop.f32.mrf.mxu0
        %v335 = vadd.f32 0.0, %v334
        %336 = vdwg.mxu0
        %v337 = vrsqrt.pop %v332
        %v338 = vmul.f32 %v337, %v332
        %v339 = vmul.f32 %v338, %v337
        %v340 = vmul.f32 0.5, %v339
        %v341 = vsub.f32 1.5, %v340
        %v342 = vmul.f32 %v337, %v341
        %v343 = vmul.f32 %v332, %v342
        %vm344 = vcmp.eq.f32.partialorder %v332, inf
        %v345 = vsel %vm344, %v332, %v343
        %vm346 = vcmp.eq.f32.partialorder %v332, 0.0
        %v347 = vand.u32 %v332, 2147483648
        %v348 = vsel %vm346, %v347, %v345
        %v349 = vrsqrt.pop %v335
        %v350 = vmul.f32 %v349, %v335
        %v351 = vmul.f32 %v350, %v349
        %v352 = vmul.f32 0.5, %v351
        %v353 = vsub.f32 1.5, %v352
        %v354 = vmul.f32 %v349, %v353
        %v355 = vmul.f32 %v335, %v354
        %vm356 = vcmp.eq.f32.partialorder %v335, inf
        %v357 = vsel %vm356, %v335, %v355
        %vm358 = vcmp.eq.f32.partialorder %v335, 0.0
        %v359 = vand.u32 %v335, 2147483648
        %v360 = vsel %vm358, %v359, %v357
        %v361 = vmul.f32 %v310, %v310
        %v362 = vmul.f32 %v311, %v311
        %363 = vmatpush.msra.mxu0 1.0
        %364 = vmatpush.msra.mxu0 1.0
        %365 = vmatpush.msra.mxu0 1.0
        %366 = vmatpush.msra.mxu0 1.0
        %367 = vmatpush.msra.mxu0 1.0
        %368 = vmatpush.msra.mxu0 1.0
        %369 = vmatpush.msra.mxu0 1.0
        %370 = vmatpush.msra.mxu0 1.0
        %371 = vmatpush.msra.mxu0 1.0
        %372 = vmatpush.msra.mxu0 1.0
        %373 = vmatpush.msra.mxu0 1.0
        %374 = vmatpush.msra.mxu0 1.0
        %375 = vmatpush.msra.mxu0 1.0
        %376 = vmatpush.msra.mxu0 1.0
        %377 = vmatpush.msra.mxu0 1.0
        %378 = vmatpush.msra.mxu0 1.0
        %379 = vmatmul.f32.gmra.mxu0 %v361
        %v380 = vpop.f32.mrf.mxu0
        %v381 = vadd.f32 0.0, %v380
        %382 = vmatmul.f32.gmra.mxu0 %v362
        %v383 = vpop.f32.mrf.mxu0
        %v384 = vadd.f32 0.0, %v383
        %385 = vdwg.mxu0
        %v386 = vrsqrt.pop %v381
        %v387 = vmul.f32 %v386, %v381
        %v388 = vmul.f32 %v387, %v386
        %v389 = vmul.f32 0.5, %v388
        %v390 = vsub.f32 1.5, %v389
        %v391 = vmul.f32 %v386, %v390
        %v392 = vmul.f32 %v381, %v391
        %vm393 = vcmp.eq.f32.partialorder %v381, inf
        %v394 = vsel %vm393, %v381, %v392
        %vm395 = vcmp.eq.f32.partialorder %v381, 0.0
        %v396 = vand.u32 %v381, 2147483648
        %v397 = vsel %vm395, %v396, %v394
        %v398 = vrsqrt.pop %v384
        %v399 = vmul.f32 %v398, %v384
        %v400 = vmul.f32 %v399, %v398
        %v401 = vmul.f32 0.5, %v400
        %v402 = vsub.f32 1.5, %v401
        %v403 = vmul.f32 %v398, %v402
        %v404 = vmul.f32 %v384, %v403
        %vm405 = vcmp.eq.f32.partialorder %v384, inf
        %v406 = vsel %vm405, %v384, %v404
        %vm407 = vcmp.eq.f32.partialorder %v384, 0.0
        %v408 = vand.u32 %v384, 2147483648
        %v409 = vsel %vm407, %v408, %v406
        %v410 = vsub.f32 %v397, %v348
        %v411 = vsub.f32 %v409, %v360
        %v412 = vsub.f32 0.0, %v410
        %v413 = vsub.f32 0.0, %v411
        %v414 = vmax.f32 %v412, 0.0
        %v415 = vmax.f32 %v413, 0.0
        %v416 = vand.u32 2147483647, %v410
        %v417 = vand.u32 2147483647, %v411
        %v418 = vsub.f32 0.0, %v416
        %v419 = vsub.f32 0.0, %v417
        %v420 = vmul.f32 %v418, 1.442695
        %v421 = vpow.pop %v420
        %v422 = vmul.f32 %v419, 1.442695
        %v423 = vpow.pop %v422
        %v424 = vadd.f32 %v421, 1.0
        %v425 = vlog2.pop %v424
        %v426 = vmul.f32 %v425, 0.6931472
        %v427 = vmul.f32 -0.5, %v421
        %v428 = vadd.f32 %v427, 1.0
        %v429 = vmul.f32 %v428, %v421
        %v430 = vand.u32 2147483647, %v421
        %vm431 = vcmp.lt.f32.partialorder %v430, 0.0004427343
        %v432 = vsel %vm431, %v429, %v426
        %v433 = vadd.f32 %v423, 1.0
        %v434 = vlog2.pop %v433
        %v435 = vmul.f32 %v434, 0.6931472
        %v436 = vmul.f32 -0.5, %v423
        %v437 = vadd.f32 %v436, 1.0
        %v438 = vmul.f32 %v437, %v423
        %v439 = vand.u32 2147483647, %v423
        %vm440 = vcmp.lt.f32.partialorder %v439, 0.0004427343
        %v441 = vsel %vm440, %v438, %v435
        %v442 = vadd.f32 %v414, %v432
        %v443 = vadd.f32 %v415, %v441
        %p444 = scmp.lt.s32.totalorder %s21, 3
        // Predicated region
        $region49: #{tpu_custom_call.1} parent=31 // pred_check
          %p445 = pneg %p444
        $region50: #{tpu_custom_call.1} parent=31 // pred_check_branch
          %447 = sbr.rel (%p445) target = $region52
        $region51: #{tpu_custom_call.1} parent=31 // pred_region
          %v448 = vld [vmem:[#allocation2] sm:$0x1]
          %vm449 = vcmask 7168
          %v450 = vsel %vm449, %v442, 0.0
          %v451 = vsel %vm449, %v443, 0.0
          %v452 = vadd.f32 %v450, %v451
          %v453 = vrot.slane %v452, 4
          %v454 = vadd.f32 %v452, %v453
          %v455 = vrot.slane %v454, 2
          %v456 = vadd.f32 %v454, %v455
          %v457 = vrot.slane %v456, 1
          %v458 = vadd.f32 %v456, %v457
          %v459 = vadd.f32 %v448, %v458
          %vm460 = vcmask 0
          %461 = vst.msk [vmem:[#allocation2] sm:$0x1] %vm460, %v459
        $region52: #{tpu_custom_call.1} parent=31 // pred_fallthru
          _
        %p462 = scmp.ge.s32.totalorder %s21, 3
        // Predicated region
        $region53: #{tpu_custom_call.1} parent=31 // pred_check
          %p463 = pneg %p462
        $region54: #{tpu_custom_call.1} parent=31 // pred_check_branch
          %465 = sbr.rel (%p463) target = $region56
        $region55: #{tpu_custom_call.1} parent=31 // pred_region
          %s466 = smul.u32 %s21, 16
          %v467 = vlaneseq
          %v468 = vshrl.u32 %v467, 7
          %v469 = vadd.s32 %v468, 8
          %v470 = vstv %s466
          %v471 = vadd.s32 %v470, %v468
          %v472 = vadd.s32 %v470, %v469
          %vm473 = vcmp.lt.s32.totalorder %v471, 56
          %vm474 = vcmp.lt.s32.totalorder %v472, 56
          %v475 = vsel %vm473, %v442, 0.0
          %v476 = vsel %vm474, %v443, 0.0
          %v477 = vld [vmem:[#allocation2] sm:$0x1]
          %vm478 = vcmask 7168
          %v479 = vsel %vm478, %v475, 0.0
          %v480 = vsel %vm478, %v476, 0.0
          %v481 = vadd.f32 %v479, %v480
          %v482 = vrot.slane %v481, 4
          %v483 = vadd.f32 %v481, %v482
          %v484 = vrot.slane %v483, 2
          %v485 = vadd.f32 %v483, %v484
          %v486 = vrot.slane %v485, 1
          %v487 = vadd.f32 %v485, %v486
          %v488 = vadd.f32 %v477, %v487
          %vm489 = vcmask 0
          %490 = vst.msk [vmem:[#allocation2] sm:$0x1] %vm489, %v488
        $region56: #{tpu_custom_call.1} parent=31 // pred_fallthru
          _
        %p491 = scmp.eq.s32.totalorder %s21, 3
        // Predicated region
        $region57: #{tpu_custom_call.1} parent=31 // pred_check
          %p492 = pneg %p491
        $region58: #{tpu_custom_call.1} parent=31 // pred_check_branch
          %494 = sbr.rel (%p492) target = $region60
        $region59: #{tpu_custom_call.1} parent=31 // pred_region
          %v495 = vlaneseq
          %v496 = vand.u32 %v495, 127
          %vm497 = vcmp.eq.s32.totalorder %v496, 0
          %v498 = vld [vmem:[#allocation2] sm:$0x1]
          %500 = vset.pattern.permute.xlu0 0
          %501 = vperm.xlu0 %500, %v498
          %v502 = vpop.permute.xlu0 %501
          %v504 = vperm.slane %v502, 0
          %v505 = vsel %vm497, %v504, 0.0
          %506 = vst [vmem:[#allocation9] sm:$0x1] %v505
        $region60: #{tpu_custom_call.1} parent=31 // pred_fallthru
          _
        // Predicated region
        $region61: #{tpu_custom_call.1} parent=31 // pred_check
          %p507 = pneg %p112
        $region62: #{tpu_custom_call.1} parent=31 // pred_check_branch
          %509 = sbr.rel (%p507) target = $region64
        $region63: #{tpu_custom_call.1} parent=31 // pred_region
          %511 = vsyncadd [#allocation5], 0
          %s513 = sshll.u32 [#allocation9], 4
          %s514 = int_to_ptr.vmem [resolvable:$true] %s513
          %s515 = sshll.u32 %s3, 4
          %s516 = int_to_ptr.hbm [resolvable:$true] %s515
          %518 = dma.vmem_to_hbm [thread:$0]  %s514, 16, %s516, [#allocation5]
        $region64: #{tpu_custom_call.1} parent=31 // pred_fallthru
          _
        // Predicated region
        $region65: #{tpu_custom_call.1} parent=31 // pred_check
          %p519 = pneg %p112
        $region66: #{tpu_custom_call.1} parent=31 // pred_check_branch
          %521 = sbr.rel (%p519) target = $region68
        $region67: #{tpu_custom_call.1} parent=31 // pred_region
          %523 = dma.done [#allocation5], 16
        $region68: #{tpu_custom_call.1} parent=31 // pred_fallthru
          _
      $region32: #{tpu_custom_call.1} parent=5 // pred_fallthru
        _
      %p524 = scmp.le.s32.totalorder 2, %s16
      // Predicated region
      $region69: #{tpu_custom_call.1} parent=5 // pred_check
        %p525 = pneg %p524
      $region70: #{tpu_custom_call.1} parent=5 // pred_check_branch
        %527 = sbr.rel (%p525) target = $region72
      $region71: #{tpu_custom_call.1} parent=5 // pred_region
        %s528 = ssub.s32 %s16, 2
      $region72: #{tpu_custom_call.1} parent=5 // pred_fallthru
        _
    $region6: #{tpu_custom_call.1} parent=1 // loop_footer
      %s20 = sadd.s32 1, %s16
    $region7: #{tpu_custom_call.1} parent=1 // loop_footer_branch
      %15 = sbr.rel target = $region3
    $region8: #{tpu_custom_call.1} parent=1 // loop_exit
      _
    %529 = vsyncpa [#allocation4], 1
    %s530 = scalar_lea.sflag [#allocation4], 1
    %531 = vsyncpa %s530, 1
    %532 = vsyncpa [#allocation7], 1
    %s533 = scalar_lea.sflag [#allocation7], 1
    %534 = vsyncpa %s533, 1
    %535 = vsyncpa [#allocation5], 1
    %s536 = scalar_lea.sflag [#allocation5], 1
    %537 = vsyncpa %s536, 1

</llo_original>
